<compile_context>
chip_gen: v7x
topology: tpu7x:2x2x1
jax: 0.10.0
libtpu: 0.0.40
codegen_flags: <defaults>
</compile_context>

<pallas_src>
import functools

import jax
import jax.numpy as jnp
from jax.experimental import pallas as pl
from jax.experimental.pallas import tpu as pltpu


def _round_up(x, m):
    return ((x + m - 1) // m) * m


def _vmem_capacity_bytes():
    try:
        return int(pltpu.get_tpu_info().vmem_capacity_bytes)
    except Exception:
        return 64 * 1024 * 1024  # conservative fallback (v7x per-TC VMEM)


def _resident_vmem_bytes(tb, d_in, d_out, in_isz, out_isz):
    w = 2 * 2 * (d_in * d_out + d_out * d_out)            # double-buffered bf16 weights
    xio = 2 * tb * d_in * in_isz + 2 * tb * d_out * out_isz
    h = 2 * tb * d_out * 4                                 # f32 intermediate + headroom
    return w + xio + h


def _streamed_vmem_bytes(tb, tk, d_in, d_out, in_isz, out_isz):
    w = 2 * 2 * (d_in * tk + tk * d_out)                   # double-buffered bf16 blocks
    xio = 2 * tb * d_in * in_isz + 2 * tb * d_out * out_isz
    acc = tb * d_out * 4
    h = 2 * tb * tk * 4
    return w + xio + acc + h


# ----------------------------- kernels ---------------------------------------

def expert_resident_kernel(x_ref, w1_ref, b1_ref, w2_ref, b2_ref, o_ref):
    """W1/W2 fully resident in VMEM; grid loops over batch tiles only."""
    x = x_ref[...].astype(jnp.bfloat16)     # cast inside the kernel (no extra HBM pass)
    h = jnp.dot(x, w1_ref[...], preferred_element_type=jnp.float32)
    h = jnp.maximum(h + b1_ref[...], 0.0)
    y = jnp.dot(h.astype(jnp.bfloat16), w2_ref[...],
                preferred_element_type=jnp.float32)
    o_ref[...] = (y + b2_ref[...]).astype(o_ref.dtype)


def expert_streamed_kernel(x_ref, w1_ref, b1_ref, w2_ref, b2_ref, o_ref, acc_ref):
    """Weights streamed in blocks over the hidden dim (fc1's N == fc2's K).

    grid = (batch tile i [parallel], hidden block k [arbitrary / reduction]).
    """
    k = pl.program_id(1)

    @pl.when(k == 0)
    def _():
        acc_ref[...] = jnp.zeros_like(acc_ref)

    x = x_ref[...].astype(jnp.bfloat16)
    h = jnp.dot(x, w1_ref[...], preferred_element_type=jnp.float32)
    h = jnp.maximum(h + b1_ref[...], 0.0)
    acc_ref[...] += jnp.dot(h.astype(jnp.bfloat16), w2_ref[...],
                            preferred_element_type=jnp.float32)

    @pl.when(k == pl.num_programs(1) - 1)
    def _():
        o_ref[...] = (acc_ref[...] + b2_ref[...]).astype(o_ref.dtype)


# --------------------------- host-side wrapper --------------------------------

def prepare_expert_params(w1, b1, w2, b2):
    """One-time (init-time) parameter preparation.

    Hoists the bf16 cast / bias reshape out of the per-call path so the forward
    does no extra HBM passes over static weights.
    """
    w1 = jnp.asarray(w1, jnp.bfloat16)
    w2 = jnp.asarray(w2, jnp.bfloat16)
    b1 = jnp.asarray(b1, jnp.float32).reshape(1, -1)
    b2 = jnp.asarray(b2, jnp.float32).reshape(1, -1)
    return w1, b1, w2, b2


def expert_forward(x, w1, b1, w2, b2, path="auto"):
    """y = fc2(relu(fc1(x))).  Weights must come from prepare_expert_params."""
    B, d_in = x.shape
    d_out = w1.shape[1]
    assert w1.shape == (d_in, d_out)
    assert w2.shape == (d_out, d_out)
    assert b1.shape == (1, d_out) and b2.shape == (1, d_out)

    cap = _vmem_capacity_bytes()
    vmem_limit = int(cap * 0.85)           # generation-aware scoped-VMEM ask
    in_isz = x.dtype.itemsize
    out_isz = x.dtype.itemsize

    # --- batch tile: big on 128-MiB parts (v5e/v6e), tighter on v7x (64 MiB) ---
    tb = 512 if cap >= (96 << 20) else 256
    tb = min(tb, _round_up(B, 128))
    if B > 128:
        # >= 2 batch tiles so both v7x TensorCores get work and the pipeline
        # has something to overlap.
        tb = min(tb, max(128, _round_up(pl.cdiv(B, 2), 128)))
    else:
        tb = min(tb, max(8, _round_up(B, 8)))

    # --- choose weight residency vs streamed weights from the VMEM budget ---
    if path == "auto":
        fits = _resident_vmem_bytes(tb, d_in, d_out, in_isz, out_isz) <= vmem_limit
        while not fits and tb > 128:
            tb = max(128, tb // 2)
            fits = _resident_vmem_bytes(tb, d_in, d_out, in_isz, out_isz) <= vmem_limit
        path = "resident" if fits else "streamed"

    out_shape = jax.ShapeDtypeStruct((B, d_out), x.dtype)

    if path == "resident":
        grid_b = pl.cdiv(B, tb)
        return pl.pallas_call(
            expert_resident_kernel,
            out_shape=out_shape,
            grid_spec=pltpu.PrefetchScalarGridSpec(
                num_scalar_prefetch=0,
                grid=(grid_b,),
                in_specs=[
                    pl.BlockSpec((tb, d_in), lambda i: (i, 0)),      # x tile (streamed)
                    pl.BlockSpec((d_in, d_out), lambda i: (0, 0)),   # W1 (resident)
                    pl.BlockSpec((1, d_out), lambda i: (0, 0)),      # b1
                    pl.BlockSpec((d_out, d_out), lambda i: (0, 0)),  # W2 (resident)
                    pl.BlockSpec((1, d_out), lambda i: (0, 0)),      # b2
                ],
                out_specs=pl.BlockSpec((tb, d_out), lambda i: (i, 0)),
            ),
            compiler_params=pltpu.CompilerParams(
                dimension_semantics=("parallel",),
                vmem_limit_bytes=vmem_limit,
            ),
        )(x, w1, b1, w2, b2)

    # ---- streamed-weight path (large experts that don't fit VMEM) ----
    if d_out % 128 != 0:
        # TODO(synk): streamed-weight Pallas path for non-128-aligned hidden dims;
        # fall back to plain XLA there (same bf16/f32 precision policy).
        xb = x.astype(jnp.bfloat16)
        h = jnp.maximum(
            jnp.dot(xb, w1, preferred_element_type=jnp.float32) + b1, 0.0)
        y = jnp.dot(h.astype(jnp.bfloat16), w2,
                    preferred_element_type=jnp.float32) + b2
        return y.astype(x.dtype)

    tk = next(c for c in (512, 256, 128) if d_out % c == 0)
    while tk > 128 and _streamed_vmem_bytes(tb, tk, d_in, d_out,
                                            in_isz, out_isz) > vmem_limit:
        tk //= 2
    while tb > 128 and _streamed_vmem_bytes(tb, tk, d_in, d_out,
                                            in_isz, out_isz) > vmem_limit:
        tb = max(128, tb // 2)
    grid_b = pl.cdiv(B, tb)

    return pl.pallas_call(
        expert_streamed_kernel,
        out_shape=out_shape,
        grid_spec=pltpu.PrefetchScalarGridSpec(
            num_scalar_prefetch=0,
            grid=(grid_b, d_out // tk),
            in_specs=[
                pl.BlockSpec((tb, d_in), lambda i, k: (i, 0)),     # x (held across k)
                pl.BlockSpec((d_in, tk), lambda i, k: (0, k)),     # W1 column block
                pl.BlockSpec((1, tk), lambda i, k: (0, k)),        # b1 block
                pl.BlockSpec((tk, d_out), lambda i, k: (k, 0)),    # W2 row block
                pl.BlockSpec((1, d_out), lambda i, k: (0, 0)),     # b2 (resident)
            ],
            out_specs=pl.BlockSpec((tb, d_out), lambda i, k: (i, 0)),
            scratch_shapes=[pltpu.VMEM((tb, d_out), jnp.float32)],
        ),
        compiler_params=pltpu.CompilerParams(
            dimension_semantics=("parallel", "arbitrary"),
            vmem_limit_bytes=vmem_limit,
        ),
    )(x, w1, b1, w2, b2)


# -------------------------------- demo ----------------------------------------

if __name__ == "__main__":
    def make_inputs(key, B, d_in, d_out):
        kx, kw1, kb1, kw2, kb2 = jax.random.split(key, 5)
        bound1 = 1.0 / (d_in ** 0.5)
        bound2 = 1.0 / (d_out ** 0.5)
        x = jax.random.normal(kx, (B, d_in), dtype=jnp.float32)
        w1 = jax.random.uniform(kw1, (d_in, d_out), jnp.float32, -bound1, bound1)
        b1 = jax.random.uniform(kb1, (d_out,), jnp.float32, -bound1, bound1)
        w2 = jax.random.uniform(kw2, (d_out, d_out), jnp.float32, -bound2, bound2)
        b2 = jax.random.uniform(kb2, (d_out,), jnp.float32, -bound2, bound2)
        return x, w1, b1, w2, b2

    def reference(x, w1, b1, w2, b2):
        # Same precision policy as the kernel: bf16 operands, f32 accumulation.
        xb = x.astype(jnp.bfloat16).astype(jnp.float32)
        w1b = w1.astype(jnp.bfloat16).astype(jnp.float32)
        w2b = w2.astype(jnp.bfloat16).astype(jnp.float32)
        h = jnp.maximum(xb @ w1b + b1[None, :], 0.0)
        return h.astype(jnp.bfloat16).astype(jnp.float32) @ w2b + b2[None, :]

    fwd = jax.jit(expert_forward, static_argnames=("path",))
    key = jax.random.PRNGKey(0)
    k1, k2 = jax.random.split(key)

    # Case 1: ragged batch, non-128-aligned features -> resident path with
    # full-width feature blocks (no host-side padding, no post-slice).
    x, w1, b1, w2, b2 = make_inputs(k1, 200, 96, 160)
    params = prepare_expert_params(w1, b1, w2, b2)     # one-time, init-style
    out = jax.block_until_ready(fwd(x, *params, path="resident"))
    ref = reference(x, w1, b1, w2, b2)
    assert out.shape == (200, 160)
    assert jnp.allclose(out, ref, atol=2e-2, rtol=2e-2), \
        float(jnp.max(jnp.abs(out - ref)))

    # Case 2: aligned shapes, force the streamed-weight path to exercise it.
    x, w1, b1, w2, b2 = make_inputs(k2, 256, 128, 256)
    params = prepare_expert_params(w1, b1, w2, b2)
    out = jax.block_until_ready(fwd(x, *params, path="streamed"))
    ref = reference(x, w1, b1, w2, b2)
    assert out.shape == (256, 256)
    assert jnp.allclose(out, ref, atol=2e-2, rtol=2e-2), \
        float(jnp.max(jnp.abs(out - ref)))

    # Case 3: default "auto" routing (resident here, weights easily fit VMEM).
    out = jax.block_until_ready(fwd(x, *params))
    assert jnp.allclose(out, ref, atol=2e-2, rtol=2e-2), \
        float(jnp.max(jnp.abs(out - ref)))

    print("KERNEL_OK")
</pallas_src>

<mosaic_0001>
module attributes {stable_mosaic.version = 11 : i64} {
  func.func @expert_resident_kernel(%arg0: i32, %arg1: memref<128x96xf32, #tpu.memory_space<vmem>>, %arg2: memref<96x160xbf16, #tpu.memory_space<vmem>>, %arg3: memref<1x160xf32, #tpu.memory_space<vmem>>, %arg4: memref<160x160xbf16, #tpu.memory_space<vmem>>, %arg5: memref<1x160xf32, #tpu.memory_space<vmem>>, %arg6: memref<128x160xf32, #tpu.memory_space<vmem>>) attributes {dimension_semantics = [#tpu.dimension_semantics<parallel>], iteration_bounds = array<i64: 2>, scalar_prefetch = 0 : i64, scratch_operands = 0 : i64, tpu.core_type = #tpu.core_type<tc>, window_params = [{transform_indices = @transform_0, window_bounds = array<i64: 128, 96>}, {pipeline_mode = #tpu.pipeline_mode<synchronous>, transform_indices = @transform_1, window_bounds = array<i64: 96, 160>}, {pipeline_mode = #tpu.pipeline_mode<synchronous>, transform_indices = @transform_2, window_bounds = array<i64: 1, 160>}, {pipeline_mode = #tpu.pipeline_mode<synchronous>, transform_indices = @transform_3, window_bounds = array<i64: 160, 160>}, {pipeline_mode = #tpu.pipeline_mode<synchronous>, transform_indices = @transform_4, window_bounds = array<i64: 1, 160>}, {transform_indices = @transform_5, window_bounds = array<i64: 128, 160>}]} {
    %c0 = arith.constant 0 : index
    %c0_0 = arith.constant 0 : index
    %0 = vector.load %arg1[%c0, %c0_0] : memref<128x96xf32, #tpu.memory_space<vmem>>, vector<128x96xf32>
    %1 = arith.truncf %0 : vector<128x96xf32> to vector<128x96xbf16>
    %c0_1 = arith.constant 0 : index
    %c0_2 = arith.constant 0 : index
    %2 = vector.load %arg2[%c0_1, %c0_2] : memref<96x160xbf16, #tpu.memory_space<vmem>>, vector<96x160xbf16>
    %cst = arith.constant dense<0.000000e+00> : vector<128x160xf32>
    %3 = tpu.matmul %1, %2, %cst {dimension_numbers = #tpu.dot_dimension_numbers<[1], [0], [0], [1], [0, 0, 1, 1], [], []>} : vector<128x96xbf16>, vector<96x160xbf16>, vector<128x160xf32> -> vector<128x160xf32>
    %c0_3 = arith.constant 0 : index
    %c0_4 = arith.constant 0 : index
    %4 = vector.load %arg3[%c0_3, %c0_4] : memref<1x160xf32, #tpu.memory_space<vmem>>, vector<1x160xf32>
    %5 = vector.broadcast %4 : vector<1x160xf32> to vector<128x160xf32>
    %6 = arith.addf %3, %5 : vector<128x160xf32>
    %cst_5 = arith.constant 0.000000e+00 : f32
    %7 = vector.broadcast %cst_5 : f32 to vector<128x160xf32>
    %8 = arith.maximumf %6, %7 : vector<128x160xf32>
    %9 = arith.truncf %8 : vector<128x160xf32> to vector<128x160xbf16>
    %c0_6 = arith.constant 0 : index
    %c0_7 = arith.constant 0 : index
    %10 = vector.load %arg4[%c0_6, %c0_7] : memref<160x160xbf16, #tpu.memory_space<vmem>>, vector<160x160xbf16>
    %cst_8 = arith.constant dense<0.000000e+00> : vector<128x160xf32>
    %11 = tpu.matmul %9, %10, %cst_8 {dimension_numbers = #tpu.dot_dimension_numbers<[1], [0], [0], [1], [0, 0, 1, 1], [], []>} : vector<128x160xbf16>, vector<160x160xbf16>, vector<128x160xf32> -> vector<128x160xf32>
    %c0_9 = arith.constant 0 : index
    %c0_10 = arith.constant 0 : index
    %12 = vector.load %arg5[%c0_9, %c0_10] : memref<1x160xf32, #tpu.memory_space<vmem>>, vector<1x160xf32>
    %13 = vector.broadcast %12 : vector<1x160xf32> to vector<128x160xf32>
    %14 = arith.addf %11, %13 : vector<128x160xf32>
    %c0_11 = arith.constant 0 : index
    %c0_12 = arith.constant 0 : index
    %15 = vector.load %arg6[%c0_11, %c0_12] : memref<128x160xf32, #tpu.memory_space<vmem>>, vector<128x160xf32>
    tpu.vector_store %arg6[%c0_11, %c0_12], %14 {strides = array<i32>} : memref<128x160xf32, #tpu.memory_space<vmem>>, vector<128x160xf32>,
    return
  }
  func.func @transform_0(%arg0: i32) -> (i32, i32) {
    %c0_i32 = arith.constant 0 : i32
    %c0_i32_0 = arith.constant 0 : i32
    return %arg0, %c0_i32 : i32, i32
  }
  func.func @transform_1(%arg0: i32) -> (i32, i32) {
    %c0_i32 = arith.constant 0 : i32
    %c0_i32_0 = arith.constant 0 : i32
    %c0_i32_1 = arith.constant 0 : i32
    return %c0_i32, %c0_i32_0 : i32, i32
  }
  func.func @transform_2(%arg0: i32) -> (i32, i32) {
    %c0_i32 = arith.constant 0 : i32
    %c0_i32_0 = arith.constant 0 : i32
    %c0_i32_1 = arith.constant 0 : i32
    return %c0_i32, %c0_i32_0 : i32, i32
  }
  func.func @transform_3(%arg0: i32) -> (i32, i32) {
    %c0_i32 = arith.constant 0 : i32
    %c0_i32_0 = arith.constant 0 : i32
    %c0_i32_1 = arith.constant 0 : i32
    return %c0_i32, %c0_i32_0 : i32, i32
  }
  func.func @transform_4(%arg0: i32) -> (i32, i32) {
    %c0_i32 = arith.constant 0 : i32
    %c0_i32_0 = arith.constant 0 : i32
    %c0_i32_1 = arith.constant 0 : i32
    return %c0_i32, %c0_i32_0 : i32, i32
  }
  func.func @transform_5(%arg0: i32) -> (i32, i32) {
    %c0_i32 = arith.constant 0 : i32
    %c0_i32_0 = arith.constant 0 : i32
    return %arg0, %c0_i32 : i32, i32
  }
}

</mosaic_0001>

<llo_original>
// kernel: expert_forward.1
$region0: #{expert_forward.1}
  #allocation0 [shape = 'u32[]', space=smem, size = 0x4, offset = 0x4, fixed_abs, tag = 'smem constant byte address 0x4 - core index']
  #allocation1 [shape = 'u32[144,128]{1,0:T(1,128)}', space=vmem, size = 0x12000, scoped, tag = 'internal scratch']
  %s0 = inlined_call_operand.vmem [shape: f32[200,96], index: 0, kind: input, shape index: {}]
  %s1 = inlined_call_operand.vmem [shape: bf16[96,160], index: 1, kind: input, shape index: {}]
  %s2 = inlined_call_operand.vmem [shape: f32[1,160], index: 2, kind: input, shape index: {}]
  %s3 = inlined_call_operand.vmem [shape: bf16[160,160], index: 3, kind: input, shape index: {}]
  %s4 = inlined_call_operand.vmem [shape: f32[1,160], index: 4, kind: input, shape index: {}]
  %s5 = inlined_call_operand.vmem [shape: f32[200,160], index: 5, kind: output, shape index: {}]
  %s6 = sld [smem:[#allocation0]]
  $region79: #{expert_forward.1} parent=0
    _
  %s8 = ssub.s32 1, %s6
  %s9 = scalar_select 0, %s8, %s6
  $region1: #{expert_forward.1} parent=0
    #allocation2 [shape = 'u8[262144]{0}', space=vmem, size = 0x40000, scoped, tag = 'output window, operand 0']
    loop: start=0, step=1, limit=4
    $region2: #{expert_forward.1} parent=1 // loop_pre_header
      _
    $region3: #{expert_forward.1} parent=1 // loop_header
      %s11 = sphi 0, %s15
      %p12 = scmp.ge.s32.totalorder %s11, 4
      %s21 = sphi 0, %s23
      %s24 = sphi 0, %s21
      %s25 = sphi 0, %s24
      %s41 = sphi 0, %s25
      %s45 = sphi 0, %s45
      %s47 = sphi 0, %s45
      %s48 = sphi 0, %s47
      %s62 = sphi 0, %s48
      %s66 = sphi 0, %s66
      %s68 = sphi 0, %s66
      %s69 = sphi 0, %s68
      %s83 = sphi 0, %s69
      %s87 = sphi 0, %s87
      %s89 = sphi 0, %s87
      %s90 = sphi 0, %s89
      %s104 = sphi 0, %s90
      %s108 = sphi 0, %s108
      %s110 = sphi 0, %s108
      %s111 = sphi 0, %s110
      %s125 = sphi 0, %s111
      %s131 = sphi 0, %s133
      %s134 = sphi 0, %s131
      %s135 = sphi 0, %s134
      %s151 = sphi 0, %s135
    $region4: #{expert_forward.1} parent=1 // loop_header_branch
      %14 = sbr.rel (%p12) target = $region8
    $region5: #{expert_forward.1} parent=1 // loop_body
      %s16 = ssub.s32 %s11, 1
      %s17 = ssub.s32 %s11, 2
      %s18 = sadd.s32 %s11, 1
      %s19 = ssub.s32 %s11, %s18
      %p20 = scmp.eq.s32.totalorder %s19, 0
      %s22 = sadd.s32 %s21, 1
      %s23 = scalar_select %p20, %s21, %s22
      %p26 = pneg %p20
      %p27 = scmp.eq.s32.totalorder %s11, 1
      %p28 = por %p26, %p27
      %p29 = scmp.ne.s32.totalorder %s21, %s24
      %p30 = scmp.eq.s32.totalorder %s11, 0
      %p31 = por %p29, %p30
      %p32 = scmp.ne.s32.totalorder %s21, %s24
      %p33 = scmp.eq.s32.totalorder %s16, 1
      %p34 = por %p32, %p33
      %p35 = scmp.ne.s32.totalorder %s24, %s25
      %p36 = scmp.eq.s32.totalorder %s16, 0
      %p37 = por %p35, %p36
      %p38 = scmp.ne.s32.totalorder %s24, %s25
      %p39 = scmp.eq.s32.totalorder %s17, 1
      %p40 = por %p38, %p39
      %p42 = scmp.ne.s32.totalorder %s25, %s41
      %p43 = scmp.eq.s32.totalorder %s17, 0
      %p44 = por %p42, %p43
      %s46 = sadd.s32 %s45, 1
      %p49 = scmp.eq.s32.totalorder %s11, 1
      %p50 = scmp.ne.s32.totalorder %s45, %s47
      %p51 = scmp.eq.s32.totalorder %s11, 0
      %p52 = por %p50, %p51
      %p53 = scmp.ne.s32.totalorder %s45, %s47
      %p54 = scmp.eq.s32.totalorder %s16, 1
      %p55 = por %p53, %p54
      %p56 = scmp.ne.s32.totalorder %s47, %s48
      %p57 = scmp.eq.s32.totalorder %s16, 0
      %p58 = por %p56, %p57
      %p59 = scmp.ne.s32.totalorder %s47, %s48
      %p60 = scmp.eq.s32.totalorder %s17, 1
      %p61 = por %p59, %p60
      %p63 = scmp.ne.s32.totalorder %s48, %s62
      %p64 = scmp.eq.s32.totalorder %s17, 0
      %p65 = por %p63, %p64
      %s67 = sadd.s32 %s66, 1
      %p70 = scmp.eq.s32.totalorder %s11, 1
      %p71 = scmp.ne.s32.totalorder %s66, %s68
      %p72 = scmp.eq.s32.totalorder %s11, 0
      %p73 = por %p71, %p72
      %p74 = scmp.ne.s32.totalorder %s66, %s68
      %p75 = scmp.eq.s32.totalorder %s16, 1
      %p76 = por %p74, %p75
      %p77 = scmp.ne.s32.totalorder %s68, %s69
      %p78 = scmp.eq.s32.totalorder %s16, 0
      %p79 = por %p77, %p78
      %p80 = scmp.ne.s32.totalorder %s68, %s69
      %p81 = scmp.eq.s32.totalorder %s17, 1
      %p82 = por %p80, %p81
      %p84 = scmp.ne.s32.totalorder %s69, %s83
      %p85 = scmp.eq.s32.totalorder %s17, 0
      %p86 = por %p84, %p85
      %s88 = sadd.s32 %s87, 1
      %p91 = scmp.eq.s32.totalorder %s11, 1
      %p92 = scmp.ne.s32.totalorder %s87, %s89
      %p93 = scmp.eq.s32.totalorder %s11, 0
      %p94 = por %p92, %p93
      %p95 = scmp.ne.s32.totalorder %s87, %s89
      %p96 = scmp.eq.s32.totalorder %s16, 1
      %p97 = por %p95, %p96
      %p98 = scmp.ne.s32.totalorder %s89, %s90
      %p99 = scmp.eq.s32.totalorder %s16, 0
      %p100 = por %p98, %p99
      %p101 = scmp.ne.s32.totalorder %s89, %s90
      %p102 = scmp.eq.s32.totalorder %s17, 1
      %p103 = por %p101, %p102
      %p105 = scmp.ne.s32.totalorder %s90, %s104
      %p106 = scmp.eq.s32.totalorder %s17, 0
      %p107 = por %p105, %p106
      %s109 = sadd.s32 %s108, 1
      %p112 = scmp.eq.s32.totalorder %s11, 1
      %p113 = scmp.ne.s32.totalorder %s108, %s110
      %p114 = scmp.eq.s32.totalorder %s11, 0
      %p115 = por %p113, %p114
      %p116 = scmp.ne.s32.totalorder %s108, %s110
      %p117 = scmp.eq.s32.totalorder %s16, 1
      %p118 = por %p116, %p117
      %p119 = scmp.ne.s32.totalorder %s110, %s111
      %p120 = scmp.eq.s32.totalorder %s16, 0
      %p121 = por %p119, %p120
      %p122 = scmp.ne.s32.totalorder %s110, %s111
      %p123 = scmp.eq.s32.totalorder %s17, 1
      %p124 = por %p122, %p123
      %p126 = scmp.ne.s32.totalorder %s111, %s125
      %p127 = scmp.eq.s32.totalorder %s17, 0
      %p128 = por %p126, %p127
      %s129 = ssub.s32 %s11, %s18
      %p130 = scmp.eq.s32.totalorder %s129, 0
      %s132 = sadd.s32 %s131, 1
      %s133 = scalar_select %p130, %s131, %s132
      %p136 = pneg %p130
      %p137 = scmp.eq.s32.totalorder %s11, 1
      %p138 = por %p136, %p137
      %p139 = scmp.ne.s32.totalorder %s131, %s134
      %p140 = scmp.eq.s32.totalorder %s11, 0
      %p141 = por %p139, %p140
      %p142 = scmp.ne.s32.totalorder %s131, %s134
      %p143 = scmp.eq.s32.totalorder %s16, 1
      %p144 = por %p142, %p143
      %p145 = scmp.ne.s32.totalorder %s134, %s135
      %p146 = scmp.eq.s32.totalorder %s16, 0
      %p147 = por %p145, %p146
      %p148 = scmp.ne.s32.totalorder %s134, %s135
      %p149 = scmp.eq.s32.totalorder %s17, 1
      %p150 = por %p148, %p149
      %p152 = scmp.ne.s32.totalorder %s135, %s151
      %p153 = scmp.eq.s32.totalorder %s17, 0
      %p154 = por %p152, %p153
      %p155 = scmp.le.s32.totalorder 1, %s11
      %p156 = scmp.lt.s32.totalorder %s11, 3
      %p157 = pnand %p155, %p156
      %p158 = pneg %p157
      // Predicated region
      $region9: #{expert_forward.1} parent=5 // pred_check
        _
      $region10: #{expert_forward.1} parent=5 // pred_check_branch
        %160 = sbr.rel (%p157) target = $region12
      $region11: #{expert_forward.1} parent=5 // pred_region
        %s161 = ssub.s32 %s11, 1
        // Predicated region
        $region13: #{expert_forward.1} parent=11 // pred_check
          %p162 = pneg %p58
        $region14: #{expert_forward.1} parent=11 // pred_check_branch
          %164 = sbr.rel (%p162) target = $region16
        $region15: #{expert_forward.1} parent=11 // pred_region
          _
        $region16: #{expert_forward.1} parent=11 // pred_fallthru
          _
        // Predicated region
        $region17: #{expert_forward.1} parent=11 // pred_check
          %p165 = pneg %p79
        $region18: #{expert_forward.1} parent=11 // pred_check_branch
          %167 = sbr.rel (%p165) target = $region20
        $region19: #{expert_forward.1} parent=11 // pred_region
          _
        $region20: #{expert_forward.1} parent=11 // pred_fallthru
          _
        // Predicated region
        $region21: #{expert_forward.1} parent=11 // pred_check
          %p168 = pneg %p100
        $region22: #{expert_forward.1} parent=11 // pred_check_branch
          %170 = sbr.rel (%p168) target = $region24
        $region23: #{expert_forward.1} parent=11 // pred_region
          _
        $region24: #{expert_forward.1} parent=11 // pred_fallthru
          _
        // Predicated region
        $region25: #{expert_forward.1} parent=11 // pred_check
          %p171 = pneg %p121
        $region26: #{expert_forward.1} parent=11 // pred_check_branch
          %173 = sbr.rel (%p171) target = $region28
        $region27: #{expert_forward.1} parent=11 // pred_region
          _
        $region28: #{expert_forward.1} parent=11 // pred_fallthru
          _
      $region12: #{expert_forward.1} parent=5 // pred_fallthru
        _
      %p174 = scmp.lt.s32.totalorder %s11, 2
      // Predicated region
      $region29: #{expert_forward.1} parent=5 // pred_check
        %p175 = pneg %p174
      $region30: #{expert_forward.1} parent=5 // pred_check_branch
        %177 = sbr.rel (%p175) target = $region32
      $region31: #{expert_forward.1} parent=5 // pred_region
        // Predicated region
        $region33: #{expert_forward.1} parent=31 // pred_check
          %p178 = pneg %p31
        $region34: #{expert_forward.1} parent=31 // pred_check_branch
          %180 = sbr.rel (%p178) target = $region36
        $region35: #{expert_forward.1} parent=31 // pred_region
          %s181 = smul.u32 16, %s11
          %s182 = ssub.s32 25, %s181
          %p183 = scmp.lt.s32.totalorder %s182, 16
          %s184 = scalar_select %p183, %s182, 16
          %s185 = smul.u32 128, %s184
          %p186 = scmp.lt.s32.totalorder %s181, 24
          %s187 = scalar_select %p186, %s181, 24
          %s188 = smul.addr %s187, 8
          %s189 = scalar_lea.vmem %s0, %s188
          %s190 = smul.u32 16, %s11
          %s191 = ssub.s32 25, %s190
          %p192 = scmp.lt.s32.totalorder %s191, 16
          %s193 = scalar_select %p192, %s191, 16
          %s194 = smul.u32 128, %s193
        $region36: #{expert_forward.1} parent=31 // pred_fallthru
          _
      $region32: #{expert_forward.1} parent=5 // pred_fallthru
        _
      %p195 = scmp.le.s32.totalorder 1, %s11
      %p196 = scmp.lt.s32.totalorder %s11, 3
      %p197 = pnand %p195, %p196
      %p198 = pneg %p197
      // Predicated region
      $region37: #{expert_forward.1} parent=5 // pred_check
        _
      $region38: #{expert_forward.1} parent=5 // pred_check_branch
        %200 = sbr.rel (%p197) target = $region40
      $region39: #{expert_forward.1} parent=5 // pred_region
        %s201 = ssub.s32 %s11, 1
        %s202 = smul.u32 16, %s16
        %s203 = ssub.s32 25, %s202
        %p204 = scmp.lt.s32.totalorder %s203, 16
        %s205 = scalar_select %p204, %s203, 16
        %s206 = smul.u32 128, %s205
        %p207 = scmp.lt.s32.totalorder %s202, 24
        %s208 = scalar_select %p207, %s202, 24
        %s209 = smul.addr %s208, 8
        %s210 = scalar_lea.vmem %s0, %s209
        %p211 = pneg %p37
        %p212 = pneg %p34
        %p213 = pneg %p58
        %p214 = pneg %p55
        %p215 = pneg %p79
        %p216 = pneg %p76
        %p217 = pneg %p100
        %p218 = pneg %p97
        %p219 = pneg %p121
        %p220 = pneg %p118
        %p221 = pneg %p147
        %p222 = pneg %p144
        %s223 = sand.u32 %s134, 1
        %s224 = sand.u32 %s134, 1
        %s225 = smul.addr %s224, 256
        %s226 = scalar_lea.vmem [#allocation2], %s225
        %s227 = smul.u32 16, %s16
        %s228 = ssub.s32 25, %s227
        %p229 = scmp.lt.s32.totalorder %s228, 16
        %s230 = scalar_select %p229, %s228, 16
        %s231 = smul.u32 128, %s230
        %p232 = scmp.lt.s32.totalorder %s227, 24
        %s233 = scalar_select %p232, %s227, 24
        %s234 = smul.addr %s233, 8
        %s235 = scalar_lea.vmem %s0, %s234
        %s236 = smul.u32 16, %s16
        %s237 = ssub.s32 25, %s236
        %p238 = scmp.lt.s32.totalorder %s237, 16
        %s239 = scalar_select %p238, %s237, 16
        %s240 = smul.u32 128, %s239
        %s241 = smul.u32 16, %s16
        %s242 = ssub.s32 25, %s241
        %p243 = scmp.lt.s32.totalorder %s242, 16
        %s244 = scalar_select %p243, %s242, 16
        %s245 = smul.u32 128, %s244
        %s246 = smul.u32 %s245, 2
        %v248 = vld [vmem:[%s235] sm:$0xff]
        %v249 = vld [vmem:[%s235 + $0x8] sm:$0xff]
        %v250 = vld [vmem:[%s235 + $0x10] sm:$0xff]
        %v251 = vld [vmem:[%s235 + $0x18] sm:$0xff]
        %v252 = vld [vmem:[%s235 + $0x20] sm:$0xff]
        %v253 = vld [vmem:[%s235 + $0x28] sm:$0xff]
        %v254 = vld [vmem:[%s235 + $0x30] sm:$0xff]
        %v255 = vld [vmem:[%s235 + $0x38] sm:$0xff]
        %v256 = vld [vmem:[%s235 + $0x40] sm:$0xff]
        %v257 = vld [vmem:[%s235 + $0x48] sm:$0xff]
        %v258 = vld [vmem:[%s235 + $0x50] sm:$0xff]
        %v259 = vld [vmem:[%s235 + $0x58] sm:$0xff]
        %v260 = vld [vmem:[%s235 + $0x60] sm:$0xff]
        %v261 = vld [vmem:[%s235 + $0x68] sm:$0xff]
        %v262 = vld [vmem:[%s235 + $0x70] sm:$0xff]
        %v263 = vld [vmem:[%s235 + $0x78] sm:$0xff]
        %v264 = vpack.c.bf16 %v249, %v248
        %v265 = vpack.c.bf16 %v251, %v250
        %v266 = vpack.c.bf16 %v253, %v252
        %v267 = vpack.c.bf16 %v255, %v254
        %v268 = vpack.c.bf16 %v257, %v256
        %v269 = vpack.c.bf16 %v259, %v258
        %v270 = vpack.c.bf16 %v261, %v260
        %v271 = vpack.c.bf16 %v263, %v262
        %v272 = vld [vmem:[%s1] sm:$0xff]
        %v273 = vld [vmem:[%s1 + $0x8] sm:$0xff]
        %v274 = vld [vmem:[%s1 + $0x10] sm:$0xff]
        %v275 = vld [vmem:[%s1 + $0x18] sm:$0xff]
        %v276 = vld [vmem:[%s1 + $0x20] sm:$0xff]
        %v277 = vld [vmem:[%s1 + $0x28] sm:$0xff]
        %v278 = vld [vmem:[%s1 + $0x30] sm:$0xff]
        %v279 = vld [vmem:[%s1 + $0x38] sm:$0xff]
        %v280 = vld [vmem:[%s1 + $0x40] sm:$0xff]
        %v281 = vld [vmem:[%s1 + $0x48] sm:$0xff]
        %v282 = vld [vmem:[%s1 + $0x50] sm:$0xff]
        %v283 = vld [vmem:[%s1 + $0x58] sm:$0xff]
        %v284 = vld [vmem:[%s2] sm:$0x3]
        %v286 = vlaneseq
        %v287 = vshrl.u32 %v286, 7
        %v288 = vsub.s32 0, %v287
        %v289 = vrot.slane %v284, %v288
        %v290 = vlaneseq
        %v291 = vshrl.u32 %v290, 7
        %v292 = vsub.s32 1, %v291
        %v293 = vrot.slane %v284, %v292
        %v308 = vunpack.c.l.b16 %v272
        %v309 = vunpack.c.h.b16 %v272
        %v310 = vunpack.c.l.b16 %v273
        %v311 = vunpack.c.h.b16 %v273
        %v312 = vunpack.c.l.b16 %v274
        %v313 = vunpack.c.h.b16 %v274
        %v314 = vunpack.c.l.b16 %v275
        %v315 = vunpack.c.h.b16 %v275
        %v316 = vunpack.c.l.b16 %v276
        %v317 = vunpack.c.h.b16 %v276
        %v318 = vunpack.c.l.b16 %v277
        %v319 = vunpack.c.h.b16 %v277
        %v320 = vunpack.c.l.b16 %v278
        %v321 = vunpack.c.h.b16 %v278
        %v322 = vunpack.c.l.b16 %v279
        %v323 = vunpack.c.h.b16 %v279
        %v324 = vunpack.c.l.b16 %v280
        %v325 = vunpack.c.h.b16 %v280
        %v326 = vunpack.c.l.b16 %v281
        %v327 = vunpack.c.h.b16 %v281
        %v328 = vunpack.c.l.b16 %v282
        %v329 = vunpack.c.h.b16 %v282
        %v330 = vunpack.c.l.b16 %v283
        %v331 = vunpack.c.h.b16 %v283
        %v332 = vpack.c.b16 %v310, %v308
        %v333 = vpack.c.b16 %v311, %v309
        %v334 = vpack.c.b16 %v314, %v312
        %v335 = vpack.c.b16 %v315, %v313
        %v336 = vpack.c.b16 %v318, %v316
        %v337 = vpack.c.b16 %v319, %v317
        %v338 = vpack.c.b16 %v322, %v320
        %v339 = vpack.c.b16 %v323, %v321
        %v340 = vpack.c.b16 %v326, %v324
        %v341 = vpack.c.b16 %v327, %v325
        %v342 = vpack.c.b16 %v330, %v328
        %v343 = vpack.c.b16 %v331, %v329
        %vm356 = vcmask 785408
        %v358 = vsel %vm356, %v264, 0
        %v361 = vsel %vm356, %v265, 0
        %v364 = vsel %vm356, %v266, 0
        %v367 = vsel %vm356, %v267, 0
        %v370 = vsel %vm356, %v268, 0
        %v373 = vsel %vm356, %v269, 0
        %v376 = vsel %vm356, %v270, 0
        %v379 = vsel %vm356, %v271, 0
        %381 = vmatprep.subr.bf16.mxu0 %v333
        %382 = vmatpush1.bf16.msra.mxu0 %v332
        %383 = vmatprep.subr.bf16.mxu0 %v335
        %384 = vmatpush1.bf16.msra.mxu0 %v334
        %385 = vmatprep.subr.bf16.mxu0 %v337
        %386 = vmatpush1.bf16.msra.mxu0 %v336
        %387 = vmatprep.subr.bf16.mxu0 %v339
        %388 = vmatpush1.bf16.msra.mxu0 %v338
        %389 = vmatprep.subr.bf16.mxu0 %v341
        %390 = vmatpush1.bf16.msra.mxu0 %v340
        %391 = vmatprep.subr.bf16.mxu0 %v343
        %392 = vmatpush1.bf16.msra.mxu0 %v342
        %393 = vmatprep.subr.bf16.mxu0 0
        %394 = vmatpush1.bf16.msra.mxu0 0
        %395 = vmatprep.subr.bf16.mxu0 0
        %396 = vmatpush1.bf16.msra.mxu0 0
        %397 = vmatprep.subr.bf16.mxu0 0
        %398 = vmatpush1.bf16.msra.mxu0 0
        %399 = vmatprep.subr.bf16.mxu0 0
        %400 = vmatpush1.bf16.msra.mxu0 0
        %401 = vmatprep.subr.bf16.mxu0 0
        %402 = vmatpush1.bf16.msra.mxu0 0
        %403 = vmatprep.subr.bf16.mxu0 0
        %404 = vmatpush1.bf16.msra.mxu0 0
        %405 = vmatprep.subr.bf16.mxu0 0
        %406 = vmatpush1.bf16.msra.mxu0 0
        %407 = vmatprep.subr.bf16.mxu0 0
        %408 = vmatpush1.bf16.msra.mxu0 0
        %409 = vmatprep.subr.bf16.mxu0 0
        %410 = vmatpush1.bf16.msra.mxu0 0
        %411 = vmatprep.subr.bf16.mxu0 0
        %412 = vmatpush1.bf16.msra.mxu0 0
        %413 = vmatprep.mubr.bf16.mxu0 0
        %414 = vmatmul.mubr.bf16.gmra.mrb[0].mxu0 %v358
        %v415 = vpop.f32.mrb[0].mxu0
        %v416 = vadd.f32 %v289, %v415
        %v417 = vpop.f32.mrb[0].mxu0
        %v418 = vadd.f32 %v293, %v417
        %v419 = vpop.f32.mrb[0].mxu0
        %v420 = vadd.f32 %v289, %v419
        %v421 = vpop.f32.mrb[0].mxu0
        %v422 = vadd.f32 %v293, %v421
        %423 = vmatprep.mubr.bf16.mxu0 0
        %424 = vmatmul.mubr.bf16.gmra.mrb[0].mxu0 %v361
        %v425 = vpop.f32.mrb[0].mxu0
        %v426 = vadd.f32 %v289, %v425
        %v427 = vpop.f32.mrb[0].mxu0
        %v428 = vadd.f32 %v293, %v427
        %v429 = vpop.f32.mrb[0].mxu0
        %v430 = vadd.f32 %v289, %v429
        %v431 = vpop.f32.mrb[0].mxu0
        %v432 = vadd.f32 %v293, %v431
        %433 = vmatprep.mubr.bf16.mxu0 0
        %434 = vmatmul.mubr.bf16.gmra.mrb[0].mxu0 %v364
        %v435 = vpop.f32.mrb[0].mxu0
        %v436 = vadd.f32 %v289, %v435
        %v437 = vpop.f32.mrb[0].mxu0
        %v438 = vadd.f32 %v293, %v437
        %v439 = vpop.f32.mrb[0].mxu0
        %v440 = vadd.f32 %v289, %v439
        %v441 = vpop.f32.mrb[0].mxu0
        %v442 = vadd.f32 %v293, %v441
        %443 = vmatprep.mubr.bf16.mxu0 0
        %444 = vmatmul.mubr.bf16.gmra.mrb[0].mxu0 %v367
        %v445 = vpop.f32.mrb[0].mxu0
        %v446 = vadd.f32 %v289, %v445
        %v447 = vpop.f32.mrb[0].mxu0
        %v448 = vadd.f32 %v293, %v447
        %v449 = vpop.f32.mrb[0].mxu0
        %v450 = vadd.f32 %v289, %v449
        %v451 = vpop.f32.mrb[0].mxu0
        %v452 = vadd.f32 %v293, %v451
        %453 = vmatprep.mubr.bf16.mxu0 0
        %454 = vmatmul.mubr.bf16.gmra.mrb[0].mxu0 %v370
        %v455 = vpop.f32.mrb[0].mxu0
        %v456 = vadd.f32 %v289, %v455
        %v457 = vpop.f32.mrb[0].mxu0
        %v458 = vadd.f32 %v293, %v457
        %v459 = vpop.f32.mrb[0].mxu0
        %v460 = vadd.f32 %v289, %v459
        %v461 = vpop.f32.mrb[0].mxu0
        %v462 = vadd.f32 %v293, %v461
        %463 = vmatprep.mubr.bf16.mxu0 0
        %464 = vmatmul.mubr.bf16.gmra.mrb[0].mxu0 %v373
        %v465 = vpop.f32.mrb[0].mxu0
        %v466 = vadd.f32 %v289, %v465
        %v467 = vpop.f32.mrb[0].mxu0
        %v468 = vadd.f32 %v293, %v467
        %v469 = vpop.f32.mrb[0].mxu0
        %v470 = vadd.f32 %v289, %v469
        %v471 = vpop.f32.mrb[0].mxu0
        %v472 = vadd.f32 %v293, %v471
        %473 = vmatprep.mubr.bf16.mxu0 0
        %474 = vmatmul.mubr.bf16.gmra.mrb[0].mxu0 %v376
        %v475 = vpop.f32.mrb[0].mxu0
        %v476 = vadd.f32 %v289, %v475
        %v477 = vpop.f32.mrb[0].mxu0
        %v478 = vadd.f32 %v293, %v477
        %v479 = vpop.f32.mrb[0].mxu0
        %v480 = vadd.f32 %v289, %v479
        %v481 = vpop.f32.mrb[0].mxu0
        %v482 = vadd.f32 %v293, %v481
        %483 = vmatprep.mubr.bf16.mxu0 0
        %484 = vmatmul.mubr.bf16.gmra.mrb[0].mxu0 %v379
        %v485 = vpop.f32.mrb[0].mxu0
        %v486 = vadd.f32 %v289, %v485
        %v487 = vpop.f32.mrb[0].mxu0
        %v488 = vadd.f32 %v293, %v487
        %v489 = vpop.f32.mrb[0].mxu0
        %v490 = vadd.f32 %v289, %v489
        %v491 = vpop.f32.mrb[0].mxu0
        %v492 = vadd.f32 %v293, %v491
        %493 = vdwg.mxu0
        %v494 = vmax.f32 %v416, 0.0
        %v495 = vmax.f32 %v418, 0.0
        %v496 = vmax.f32 %v420, 0.0
        %v497 = vmax.f32 %v422, 0.0
        %v498 = vmax.f32 %v426, 0.0
        %v499 = vmax.f32 %v428, 0.0
        %v500 = vmax.f32 %v430, 0.0
        %v501 = vmax.f32 %v432, 0.0
        %v502 = vmax.f32 %v436, 0.0
        %v503 = vmax.f32 %v438, 0.0
        %v504 = vmax.f32 %v440, 0.0
        %v505 = vmax.f32 %v442, 0.0
        %v506 = vmax.f32 %v446, 0.0
        %v507 = vmax.f32 %v448, 0.0
        %v508 = vmax.f32 %v450, 0.0
        %v509 = vmax.f32 %v452, 0.0
        %v510 = vmax.f32 %v456, 0.0
        %v511 = vmax.f32 %v458, 0.0
        %v512 = vmax.f32 %v460, 0.0
        %v513 = vmax.f32 %v462, 0.0
        %v514 = vmax.f32 %v466, 0.0
        %v515 = vmax.f32 %v468, 0.0
        %v516 = vmax.f32 %v470, 0.0
        %v517 = vmax.f32 %v472, 0.0
        %v518 = vmax.f32 %v476, 0.0
        %v519 = vmax.f32 %v478, 0.0
        %v520 = vmax.f32 %v480, 0.0
        %v521 = vmax.f32 %v482, 0.0
        %v522 = vmax.f32 %v486, 0.0
        %v523 = vmax.f32 %v488, 0.0
        %v524 = vmax.f32 %v490, 0.0
        %v525 = vmax.f32 %v492, 0.0
        %v526 = vpack.c.bf16 %v496, %v494
        %v527 = vpack.c.bf16 %v497, %v495
        %v528 = vpack.c.bf16 %v500, %v498
        %v529 = vpack.c.bf16 %v501, %v499
        %v530 = vpack.c.bf16 %v504, %v502
        %v531 = vpack.c.bf16 %v505, %v503
        %v532 = vpack.c.bf16 %v508, %v506
        %v533 = vpack.c.bf16 %v509, %v507
        %v534 = vpack.c.bf16 %v512, %v510
        %v535 = vpack.c.bf16 %v513, %v511
        %v536 = vpack.c.bf16 %v516, %v514
        %v537 = vpack.c.bf16 %v517, %v515
        %v538 = vpack.c.bf16 %v520, %v518
        %v539 = vpack.c.bf16 %v521, %v519
        %v540 = vpack.c.bf16 %v524, %v522
        %v541 = vpack.c.bf16 %v525, %v523
        %v542 = vld [vmem:[%s3] sm:$0xff]
        %v543 = vld [vmem:[%s3 + $0x8] sm:$0xff]
        %v544 = vld [vmem:[%s3 + $0x10] sm:$0xff]
        %v545 = vld [vmem:[%s3 + $0x18] sm:$0xff]
        %v546 = vld [vmem:[%s3 + $0x20] sm:$0xff]
        %v547 = vld [vmem:[%s3 + $0x28] sm:$0xff]
        %v548 = vld [vmem:[%s3 + $0x30] sm:$0xff]
        %v549 = vld [vmem:[%s3 + $0x38] sm:$0xff]
        %v550 = vld [vmem:[%s3 + $0x40] sm:$0xff]
        %v551 = vld [vmem:[%s3 + $0x48] sm:$0xff]
        %v552 = vld [vmem:[%s3 + $0x50] sm:$0xff]
        %v553 = vld [vmem:[%s3 + $0x58] sm:$0xff]
        %v554 = vld [vmem:[%s3 + $0x60] sm:$0xff]
        %v555 = vld [vmem:[%s3 + $0x68] sm:$0xff]
        %v556 = vld [vmem:[%s3 + $0x70] sm:$0xff]
        %v557 = vld [vmem:[%s3 + $0x78] sm:$0xff]
        %v558 = vld [vmem:[%s3 + $0x80] sm:$0xff]
        %v559 = vld [vmem:[%s3 + $0x88] sm:$0xff]
        %v560 = vld [vmem:[%s3 + $0x90] sm:$0xff]
        %v561 = vld [vmem:[%s3 + $0x98] sm:$0xff]
        %v562 = vld [vmem:[%s4] sm:$0x3]
        %v564 = vlaneseq
        %v565 = vshrl.u32 %v564, 7
        %v566 = vsub.s32 0, %v565
        %v567 = vrot.slane %v562, %v566
        %v568 = vlaneseq
        %v569 = vshrl.u32 %v568, 7
        %v570 = vsub.s32 1, %v569
        %v571 = vrot.slane %v562, %v570
        %v594 = vunpack.c.l.b16 %v542
        %v595 = vunpack.c.h.b16 %v542
        %v596 = vunpack.c.l.b16 %v543
        %v597 = vunpack.c.h.b16 %v543
        %v598 = vunpack.c.l.b16 %v544
        %v599 = vunpack.c.h.b16 %v544
        %v600 = vunpack.c.l.b16 %v545
        %v601 = vunpack.c.h.b16 %v545
        %v602 = vunpack.c.l.b16 %v546
        %v603 = vunpack.c.h.b16 %v546
        %v604 = vunpack.c.l.b16 %v547
        %v605 = vunpack.c.h.b16 %v547
        %v606 = vunpack.c.l.b16 %v548
        %v607 = vunpack.c.h.b16 %v548
        %v608 = vunpack.c.l.b16 %v549
        %v609 = vunpack.c.h.b16 %v549
        %v610 = vunpack.c.l.b16 %v550
        %v611 = vunpack.c.h.b16 %v550
        %v612 = vunpack.c.l.b16 %v551
        %v613 = vunpack.c.h.b16 %v551
        %v614 = vunpack.c.l.b16 %v552
        %v615 = vunpack.c.h.b16 %v552
        %v616 = vunpack.c.l.b16 %v553
        %v617 = vunpack.c.h.b16 %v553
        %v618 = vunpack.c.l.b16 %v554
        %v619 = vunpack.c.h.b16 %v554
        %v620 = vunpack.c.l.b16 %v555
        %v621 = vunpack.c.h.b16 %v555
        %v622 = vunpack.c.l.b16 %v556
        %v623 = vunpack.c.h.b16 %v556
        %v624 = vunpack.c.l.b16 %v557
        %v625 = vunpack.c.h.b16 %v557
        %v626 = vunpack.c.l.b16 %v558
        %v627 = vunpack.c.h.b16 %v558
        %v628 = vunpack.c.l.b16 %v559
        %v629 = vunpack.c.h.b16 %v559
        %v630 = vunpack.c.l.b16 %v560
        %v631 = vunpack.c.h.b16 %v560
        %v632 = vunpack.c.l.b16 %v561
        %v633 = vunpack.c.h.b16 %v561
        %v634 = vpack.c.b16 %v596, %v594
        %v635 = vpack.c.b16 %v597, %v595
        %v636 = vpack.c.b16 %v600, %v598
        %v637 = vpack.c.b16 %v601, %v599
        %v638 = vpack.c.b16 %v604, %v602
        %v639 = vpack.c.b16 %v605, %v603
        %v640 = vpack.c.b16 %v608, %v606
        %v641 = vpack.c.b16 %v609, %v607
        %v642 = vpack.c.b16 %v612, %v610
        %v643 = vpack.c.b16 %v613, %v611
        %v644 = vpack.c.b16 %v616, %v614
        %v645 = vpack.c.b16 %v617, %v615
        %v646 = vpack.c.b16 %v620, %v618
        %v647 = vpack.c.b16 %v621, %v619
        %v648 = vpack.c.b16 %v624, %v622
        %v649 = vpack.c.b16 %v625, %v623
        %v650 = vpack.c.b16 %v628, %v626
        %v651 = vpack.c.b16 %v629, %v627
        %v652 = vpack.c.b16 %v632, %v630
        %v653 = vpack.c.b16 %v633, %v631
        %vm674 = vcmask 261120
        %v676 = vsel %vm674, %v527, 0
        %v679 = vsel %vm674, %v529, 0
        %v682 = vsel %vm674, %v531, 0
        %v685 = vsel %vm674, %v533, 0
        %v688 = vsel %vm674, %v535, 0
        %v691 = vsel %vm674, %v537, 0
        %v694 = vsel %vm674, %v539, 0
        %v697 = vsel %vm674, %v541, 0
        %699 = vmatprep.subr.bf16.mxu0 %v635
        %700 = vmatpush1.bf16.msra.mxu0 %v634
        %701 = vmatprep.subr.bf16.mxu0 %v637
        %702 = vmatpush1.bf16.msra.mxu0 %v636
        %703 = vmatprep.subr.bf16.mxu0 %v639
        %704 = vmatpush1.bf16.msra.mxu0 %v638
        %705 = vmatprep.subr.bf16.mxu0 %v641
        %706 = vmatpush1.bf16.msra.mxu0 %v640
        %707 = vmatprep.subr.bf16.mxu0 %v643
        %708 = vmatpush1.bf16.msra.mxu0 %v642
        %709 = vmatprep.subr.bf16.mxu0 %v645
        %710 = vmatpush1.bf16.msra.mxu0 %v644
        %711 = vmatprep.subr.bf16.mxu0 %v647
        %712 = vmatpush1.bf16.msra.mxu0 %v646
        %713 = vmatprep.subr.bf16.mxu0 %v649
        %714 = vmatpush1.bf16.msra.mxu0 %v648
        %715 = vmatprep.subr.bf16.mxu0 %v651
        %716 = vmatpush1.bf16.msra.mxu0 %v650
        %717 = vmatprep.subr.bf16.mxu0 %v653
        %718 = vmatpush1.bf16.msra.mxu0 %v652
        %719 = vmatprep.subr.bf16.mxu0 0
        %720 = vmatpush1.bf16.msra.mxu0 0
        %721 = vmatprep.subr.bf16.mxu0 0
        %722 = vmatpush1.bf16.msra.mxu0 0
        %723 = vmatprep.subr.bf16.mxu0 0
        %724 = vmatpush1.bf16.msra.mxu0 0
        %725 = vmatprep.subr.bf16.mxu0 0
        %726 = vmatpush1.bf16.msra.mxu0 0
        %727 = vmatprep.subr.bf16.mxu0 0
        %728 = vmatpush1.bf16.msra.mxu0 0
        %729 = vmatprep.subr.bf16.mxu0 0
        %730 = vmatpush1.bf16.msra.mxu0 0
        %731 = vmatprep.mubr.bf16.mxu0 %v676
        %732 = vmatmul.mubr.bf16.gmra.mrb[0].mxu0 %v526
        %v733 = vpop.f32.mrb[0].mxu0
        %v734 = vadd.f32 %v567, %v733
        %v735 = vpop.f32.mrb[0].mxu0
        %v736 = vadd.f32 %v571, %v735
        %v737 = vpop.f32.mrb[0].mxu0
        %v738 = vadd.f32 %v567, %v737
        %v739 = vpop.f32.mrb[0].mxu0
        %v740 = vadd.f32 %v571, %v739
        %741 = vmatprep.mubr.bf16.mxu0 %v679
        %742 = vmatmul.mubr.bf16.gmra.mrb[0].mxu0 %v528
        %v743 = vpop.f32.mrb[0].mxu0
        %v744 = vadd.f32 %v567, %v743
        %v745 = vpop.f32.mrb[0].mxu0
        %v746 = vadd.f32 %v571, %v745
        %v747 = vpop.f32.mrb[0].mxu0
        %v748 = vadd.f32 %v567, %v747
        %v749 = vpop.f32.mrb[0].mxu0
        %v750 = vadd.f32 %v571, %v749
        %751 = vmatprep.mubr.bf16.mxu0 %v682
        %752 = vmatmul.mubr.bf16.gmra.mrb[0].mxu0 %v530
        %v753 = vpop.f32.mrb[0].mxu0
        %v754 = vadd.f32 %v567, %v753
        %v755 = vpop.f32.mrb[0].mxu0
        %v756 = vadd.f32 %v571, %v755
        %v757 = vpop.f32.mrb[0].mxu0
        %v758 = vadd.f32 %v567, %v757
        %v759 = vpop.f32.mrb[0].mxu0
        %v760 = vadd.f32 %v571, %v759
        %761 = vmatprep.mubr.bf16.mxu0 %v685
        %762 = vmatmul.mubr.bf16.gmra.mrb[0].mxu0 %v532
        %v763 = vpop.f32.mrb[0].mxu0
        %v764 = vadd.f32 %v567, %v763
        %v765 = vpop.f32.mrb[0].mxu0
        %v766 = vadd.f32 %v571, %v765
        %v767 = vpop.f32.mrb[0].mxu0
        %v768 = vadd.f32 %v567, %v767
        %v769 = vpop.f32.mrb[0].mxu0
        %v770 = vadd.f32 %v571, %v769
        %771 = vmatprep.mubr.bf16.mxu0 %v688
        %772 = vmatmul.mubr.bf16.gmra.mrb[0].mxu0 %v534
        %v773 = vpop.f32.mrb[0].mxu0
        %v774 = vadd.f32 %v567, %v773
        %v775 = vpop.f32.mrb[0].mxu0
        %v776 = vadd.f32 %v571, %v775
        %v777 = vpop.f32.mrb[0].mxu0
        %v778 = vadd.f32 %v567, %v777
        %v779 = vpop.f32.mrb[0].mxu0
        %v780 = vadd.f32 %v571, %v779
        %781 = vmatprep.mubr.bf16.mxu0 %v691
        %782 = vmatmul.mubr.bf16.gmra.mrb[0].mxu0 %v536
        %v783 = vpop.f32.mrb[0].mxu0
        %v784 = vadd.f32 %v567, %v783
        %v785 = vpop.f32.mrb[0].mxu0
        %v786 = vadd.f32 %v571, %v785
        %v787 = vpop.f32.mrb[0].mxu0
        %v788 = vadd.f32 %v567, %v787
        %v789 = vpop.f32.mrb[0].mxu0
        %v790 = vadd.f32 %v571, %v789
        %791 = vmatprep.mubr.bf16.mxu0 %v694
        %792 = vmatmul.mubr.bf16.gmra.mrb[0].mxu0 %v538
        %v793 = vpop.f32.mrb[0].mxu0
        %v794 = vadd.f32 %v567, %v793
        %v795 = vpop.f32.mrb[0].mxu0
        %v796 = vadd.f32 %v571, %v795
        %v797 = vpop.f32.mrb[0].mxu0
        %v798 = vadd.f32 %v567, %v797
        %v799 = vpop.f32.mrb[0].mxu0
        %v800 = vadd.f32 %v571, %v799
        %801 = vmatprep.mubr.bf16.mxu0 %v697
        %802 = vmatmul.mubr.bf16.gmra.mrb[0].mxu0 %v540
        %v803 = vpop.f32.mrb[0].mxu0
        %v804 = vadd.f32 %v567, %v803
        %v805 = vpop.f32.mrb[0].mxu0
        %v806 = vadd.f32 %v571, %v805
        %v807 = vpop.f32.mrb[0].mxu0
        %v808 = vadd.f32 %v567, %v807
        %v809 = vpop.f32.mrb[0].mxu0
        %v810 = vadd.f32 %v571, %v809
        %811 = vdwg.mxu0
        %812 = vst [vmem:[%s226] sm:$0xff] %v734
        %813 = vst.msk [vmem:[%s226 + $0x8] sm:$0xff] %vm674, %v736
        %814 = vst [vmem:[%s226 + $0x10] sm:$0xff] %v738
        %815 = vst.msk [vmem:[%s226 + $0x18] sm:$0xff] %vm674, %v740
        %816 = vst [vmem:[%s226 + $0x20] sm:$0xff] %v744
        %817 = vst.msk [vmem:[%s226 + $0x28] sm:$0xff] %vm674, %v746
        %818 = vst [vmem:[%s226 + $0x30] sm:$0xff] %v748
        %819 = vst.msk [vmem:[%s226 + $0x38] sm:$0xff] %vm674, %v750
        %820 = vst [vmem:[%s226 + $0x40] sm:$0xff] %v754
        %821 = vst.msk [vmem:[%s226 + $0x48] sm:$0xff] %vm674, %v756
        %822 = vst [vmem:[%s226 + $0x50] sm:$0xff] %v758
        %823 = vst.msk [vmem:[%s226 + $0x58] sm:$0xff] %vm674, %v760
        %824 = vst [vmem:[%s226 + $0x60] sm:$0xff] %v764
        %825 = vst.msk [vmem:[%s226 + $0x68] sm:$0xff] %vm674, %v766
        %826 = vst [vmem:[%s226 + $0x70] sm:$0xff] %v768
        %827 = vst.msk [vmem:[%s226 + $0x78] sm:$0xff] %vm674, %v770
        %828 = vst [vmem:[%s226 + $0x80] sm:$0xff] %v774
        %829 = vst.msk [vmem:[%s226 + $0x88] sm:$0xff] %vm674, %v776
        %830 = vst [vmem:[%s226 + $0x90] sm:$0xff] %v778
        %831 = vst.msk [vmem:[%s226 + $0x98] sm:$0xff] %vm674, %v780
        %832 = vst [vmem:[%s226 + $0xa0] sm:$0xff] %v784
        %833 = vst.msk [vmem:[%s226 + $0xa8] sm:$0xff] %vm674, %v786
        %834 = vst [vmem:[%s226 + $0xb0] sm:$0xff] %v788
        %835 = vst.msk [vmem:[%s226 + $0xb8] sm:$0xff] %vm674, %v790
        %836 = vst [vmem:[%s226 + $0xc0] sm:$0xff] %v794
        %837 = vst.msk [vmem:[%s226 + $0xc8] sm:$0xff] %vm674, %v796
        %838 = vst [vmem:[%s226 + $0xd0] sm:$0xff] %v798
        %839 = vst.msk [vmem:[%s226 + $0xd8] sm:$0xff] %vm674, %v800
        %840 = vst [vmem:[%s226 + $0xe0] sm:$0xff] %v804
        %841 = vst.msk [vmem:[%s226 + $0xe8] sm:$0xff] %vm674, %v806
        %842 = vst [vmem:[%s226 + $0xf0] sm:$0xff] %v808
        %843 = vst.msk [vmem:[%s226 + $0xf8] sm:$0xff] %vm674, %v810
        %s844 = sand.u32 %s134, 1
        %s845 = sand.u32 %s134, 1
        %s846 = smul.addr %s845, 256
        %s847 = scalar_lea.vmem [#allocation2], %s846
        // Predicated region
        $region41: #{expert_forward.1} parent=39 // pred_check
          %p848 = pneg %p144
        $region42: #{expert_forward.1} parent=39 // pred_check_branch
          %850 = sbr.rel (%p848) target = $region44
        $region43: #{expert_forward.1} parent=39 // pred_region
          %s851 = smul.u32 16, %s16
          %s852 = ssub.s32 25, %s851
          %p853 = scmp.lt.s32.totalorder %s852, 16
          %s854 = scalar_select %p853, %s852, 16
          %s855 = smul.u32 128, %s854
          %s856 = smul.u32 %s855, 2
          %p857 = scmp.ne.s32.totalorder 0, %s856
          %s858 = smul.addr %s851, 2
          %s859 = smul.addr %s858, 8
          %s860 = scalar_lea.vmem %s5, %s859
          // Predicated region
          $region45: #{expert_forward.1} parent=43 // pred_check
            %p861 = pneg %p857
          $region46: #{expert_forward.1} parent=43 // pred_check_branch
            %863 = sbr.rel (%p861) target = $region48
          $region47: #{expert_forward.1} parent=43 // pred_region
            // Predicated region
            $region49: #{expert_forward.1} parent=47 // pred_check
              _
            $region50: #{expert_forward.1} parent=47 // pred_check_branch
              %865 = sbr.rel (0) target = $region52
            $region51: #{expert_forward.1} parent=47 // pred_region
              %s866 = sshrl.u32 %s854, 4
              // While loop
              $region53: #{expert_forward.1} parent=51 // loop_pre_header
                _
              $region54: #{expert_forward.1} parent=51 // loop_header
                %s868 = sphi 0, %s870
                %p869 = scmp.ge.s32.totalorder %s868, %s866
                %s873 = sphi 0, %s942
                %s874 = sphi %s847, %s945
                %s875 = sphi %s860, %s946
              $region55: #{expert_forward.1} parent=51 // loop_header_branch
                %872 = sbr.rel (%p869) target = $region59
              $region56: #{expert_forward.1} parent=51 // loop_body
                %v876 = vld [vmem:[%s874] sm:$0xff]
                %877 = vst [vmem:[%s875] sm:$0xff] %v876
                %v878 = vld [vmem:[%s874 + $0x10] sm:$0xff]
                %879 = vst [vmem:[%s875 + $0x10] sm:$0xff] %v878
                %v880 = vld [vmem:[%s874 + $0x20] sm:$0xff]
                %881 = vst [vmem:[%s875 + $0x20] sm:$0xff] %v880
                %v882 = vld [vmem:[%s874 + $0x30] sm:$0xff]
                %883 = vst [vmem:[%s875 + $0x30] sm:$0xff] %v882
                %v884 = vld [vmem:[%s874 + $0x40] sm:$0xff]
                %885 = vst [vmem:[%s875 + $0x40] sm:$0xff] %v884
                %v886 = vld [vmem:[%s874 + $0x50] sm:$0xff]
                %887 = vst [vmem:[%s875 + $0x50] sm:$0xff] %v886
                %v888 = vld [vmem:[%s874 + $0x60] sm:$0xff]
                %889 = vst [vmem:[%s875 + $0x60] sm:$0xff] %v888
                %v890 = vld [vmem:[%s874 + $0x70] sm:$0xff]
                %891 = vst [vmem:[%s875 + $0x70] sm:$0xff] %v890
                %v892 = vld [vmem:[%s874 + $0x80] sm:$0xff]
                %893 = vst [vmem:[%s875 + $0x80] sm:$0xff] %v892
                %v894 = vld [vmem:[%s874 + $0x90] sm:$0xff]
                %895 = vst [vmem:[%s875 + $0x90] sm:$0xff] %v894
                %v896 = vld [vmem:[%s874 + $0xa0] sm:$0xff]
                %897 = vst [vmem:[%s875 + $0xa0] sm:$0xff] %v896
                %v898 = vld [vmem:[%s874 + $0xb0] sm:$0xff]
                %899 = vst [vmem:[%s875 + $0xb0] sm:$0xff] %v898
                %v900 = vld [vmem:[%s874 + $0xc0] sm:$0xff]
                %901 = vst [vmem:[%s875 + $0xc0] sm:$0xff] %v900
                %v902 = vld [vmem:[%s874 + $0xd0] sm:$0xff]
                %903 = vst [vmem:[%s875 + $0xd0] sm:$0xff] %v902
                %v904 = vld [vmem:[%s874 + $0xe0] sm:$0xff]
                %905 = vst [vmem:[%s875 + $0xe0] sm:$0xff] %v904
                %v906 = vld [vmem:[%s874 + $0xf0] sm:$0xff]
                %907 = vst [vmem:[%s875 + $0xf0] sm:$0xff] %v906
                %v908 = vld [vmem:[%s874 + $0x8] sm:$0xff]
                %909 = vst [vmem:[%s875 + $0x8] sm:$0xff] %v908
                %v910 = vld [vmem:[%s874 + $0x18] sm:$0xff]
                %911 = vst [vmem:[%s875 + $0x18] sm:$0xff] %v910
                %v912 = vld [vmem:[%s874 + $0x28] sm:$0xff]
                %913 = vst [vmem:[%s875 + $0x28] sm:$0xff] %v912
                %v914 = vld [vmem:[%s874 + $0x38] sm:$0xff]
                %915 = vst [vmem:[%s875 + $0x38] sm:$0xff] %v914
                %v916 = vld [vmem:[%s874 + $0x48] sm:$0xff]
                %917 = vst [vmem:[%s875 + $0x48] sm:$0xff] %v916
                %v918 = vld [vmem:[%s874 + $0x58] sm:$0xff]
                %919 = vst [vmem:[%s875 + $0x58] sm:$0xff] %v918
                %v920 = vld [vmem:[%s874 + $0x68] sm:$0xff]
                %921 = vst [vmem:[%s875 + $0x68] sm:$0xff] %v920
                %v922 = vld [vmem:[%s874 + $0x78] sm:$0xff]
                %923 = vst [vmem:[%s875 + $0x78] sm:$0xff] %v922
                %v924 = vld [vmem:[%s874 + $0x88] sm:$0xff]
                %925 = vst [vmem:[%s875 + $0x88] sm:$0xff] %v924
                %v926 = vld [vmem:[%s874 + $0x98] sm:$0xff]
                %927 = vst [vmem:[%s875 + $0x98] sm:$0xff] %v926
                %v928 = vld [vmem:[%s874 + $0xa8] sm:$0xff]
                %929 = vst [vmem:[%s875 + $0xa8] sm:$0xff] %v928
                %v930 = vld [vmem:[%s874 + $0xb8] sm:$0xff]
                %931 = vst [vmem:[%s875 + $0xb8] sm:$0xff] %v930
                %v932 = vld [vmem:[%s874 + $0xc8] sm:$0xff]
                %933 = vst [vmem:[%s875 + $0xc8] sm:$0xff] %v932
                %v934 = vld [vmem:[%s874 + $0xd8] sm:$0xff]
                %935 = vst [vmem:[%s875 + $0xd8] sm:$0xff] %v934
                %v936 = vld [vmem:[%s874 + $0xe8] sm:$0xff]
                %937 = vst [vmem:[%s875 + $0xe8] sm:$0xff] %v936
                %v938 = vld [vmem:[%s874 + $0xf8] sm:$0xff]
                %939 = vst [vmem:[%s875 + $0xf8] sm:$0xff] %v938
                %s940 = sadd.s32 1, %s873
                %p941 = scmp.ge.s32.totalorder %s940, %s866
                %s942 = scalar_select %p941, 0, %s940
                %s943 = smul.u32 %s942, 256
                %s944 = smul.u32 %s942, 256
                %s945 = scalar_lea.vmem %s847, %s943 [#allocation2]
                %s946 = scalar_lea.vmem %s860, %s944
              $region57: #{expert_forward.1} parent=51 // loop_footer
                %s870 = sadd.s32 %s868, 1
              $region58: #{expert_forward.1} parent=51 // loop_footer_branch
                %867 = sbr.rel target = $region54
              $region59: #{expert_forward.1} parent=51 // loop_exit
                _
              %s947 = sshrl.u32 %s854, 4
              %s948 = sand.u32 %s854, 15
              %s949 = smul.u32 %s947, 16
              %s950 = smul.u32 16, %s949
              %s951 = scalar_lea.vmem %s847, %s950 [#allocation2]
              %s952 = smul.u32 16, %s949
              %s953 = scalar_lea.vmem %s860, %s952
              // While loop
              $region60: #{expert_forward.1} parent=51 // loop_pre_header
                _
              $region61: #{expert_forward.1} parent=51 // loop_header
                %s955 = sphi 0, %s957
                %p956 = scmp.ge.s32.totalorder %s955, %s948
                %s960 = sphi 0, %s969
                %s961 = sphi %s951, %s972
                %s962 = sphi %s953, %s973
              $region62: #{expert_forward.1} parent=51 // loop_header_branch
                %959 = sbr.rel (%p956) target = $region66
              $region63: #{expert_forward.1} parent=51 // loop_body
                %v963 = vld [vmem:[%s961] sm:$0xff]
                %964 = vst [vmem:[%s962] sm:$0xff] %v963
                %v965 = vld [vmem:[%s961 + $0x8] sm:$0xff]
                %966 = vst [vmem:[%s962 + $0x8] sm:$0xff] %v965
                %s967 = sadd.s32 1, %s960
                %p968 = scmp.ge.s32.totalorder %s967, %s948
                %s969 = scalar_select %p968, 0, %s967
                %s970 = smul.u32 %s969, 16
                %s971 = smul.u32 %s969, 16
                %s972 = scalar_lea.vmem %s951, %s970 [#allocation2]
                %s973 = scalar_lea.vmem %s953, %s971
              $region64: #{expert_forward.1} parent=51 // loop_footer
                %s957 = sadd.s32 %s955, 1
              $region65: #{expert_forward.1} parent=51 // loop_footer_branch
                %954 = sbr.rel target = $region61
              $region66: #{expert_forward.1} parent=51 // loop_exit
                _
            $region52: #{expert_forward.1} parent=47 // pred_fallthru
              _
            // Predicated region
            $region67: #{expert_forward.1} parent=47 // pred_check
              _
            $region68: #{expert_forward.1} parent=47 // pred_check_branch
              %975 = sbr.rel target = $region70
            $region69: #{expert_forward.1} parent=47 // pred_region
              _
            $region70: #{expert_forward.1} parent=47 // pred_fallthru
              _
          $region48: #{expert_forward.1} parent=43 // pred_fallthru
            _
          %976 = vnop
        $region44: #{expert_forward.1} parent=39 // pred_fallthru
          _
      $region40: #{expert_forward.1} parent=5 // pred_fallthru
        _
      %p977 = scmp.le.s32.totalorder 2, %s11
      // Predicated region
      $region71: #{expert_forward.1} parent=5 // pred_check
        %p978 = pneg %p977
      $region72: #{expert_forward.1} parent=5 // pred_check_branch
        %980 = sbr.rel (%p978) target = $region74
      $region73: #{expert_forward.1} parent=5 // pred_region
        %s981 = ssub.s32 %s11, 2
        // Predicated region
        $region75: #{expert_forward.1} parent=73 // pred_check
          %p982 = pneg %p150
        $region76: #{expert_forward.1} parent=73 // pred_check_branch
          %984 = sbr.rel (%p982) target = $region78
        $region77: #{expert_forward.1} parent=73 // pred_region
          %s985 = sand.u32 %s135, 1
          %s986 = sand.u32 %s135, 1
          %s987 = smul.addr %s986, 256
          %s988 = scalar_lea.vmem [#allocation2], %s987
        $region78: #{expert_forward.1} parent=73 // pred_fallthru
          _
      $region74: #{expert_forward.1} parent=5 // pred_fallthru
        _
    $region6: #{expert_forward.1} parent=1 // loop_footer
      %s15 = sadd.s32 1, %s11
    $region7: #{expert_forward.1} parent=1 // loop_footer_branch
      %10 = sbr.rel target = $region3
    $region8: #{expert_forward.1} parent=1 // loop_exit
      _

</llo_original>
